<compile_context>
chip_gen: v5e
topology: v5e:2x2
jax: 0.10.0
libtpu: 0.0.40
codegen_flags: <defaults>
</compile_context>

<pallas_src>
import jax
import jax.numpy as jnp
from jax.experimental import pallas as pl
from jax.experimental.pallas import tpu as pltpu

NUM_FILTERS = 24
FILTER_DIM = (5, 5)
INIT_ALPHA = -2.0


def manual_norm(w):
    # Assumed semantics of `manual_norm`: each filter normalized to unit Frobenius norm.
    n = jnp.sqrt(jnp.sum(w * w, axis=(-2, -1), keepdims=True))
    return w / n


def psf2otf(psf, shape):
    """Zero-pad psf to `shape`, circularly center it at the origin, FFT2."""
    kh, kw = psf.shape[-2:]
    pad = jnp.zeros(psf.shape[:-2] + tuple(shape), psf.dtype)
    pad = pad.at[..., :kh, :kw].set(psf)
    pad = jnp.roll(pad, shift=(-(kh // 2), -(kw // 2)), axis=(-2, -1))
    return jnp.fft.fft2(pad)


# ----------------------------- Pallas kernel ------------------------------- #

def wiener_freq_kernel(yr_ref, yi_ref, hr_ref, hi_ref, rg2_ref, fr_ref, fi_ref):
    """F = conj(H) * Y / (|H|^2 + reg_g2) — purely elementwise, HBM-bound.

    yr/yi   : (BT, C, TS)  FFT of the blurry input (real / imag)
    hr/hi   : (BT, 1, TS)  OTF of the PSF (broadcast over channels)
    rg2     : (1, 1, TS)   exp(alpha) * sum_f |G_f|^2 (grid-invariant over batch)
    fr/fi   : (BT, C, TS)  filtered spectrum (real / imag)
    """
    hr = hr_ref[...]
    hi = hi_ref[...]
    yr = yr_ref[...]
    yi = yi_ref[...]
    den = hr * hr + hi * hi + rg2_ref[...]
    inv = 1.0 / den                      # exact divide; kernel is HBM-bound anyway
    # conj(H) * Y = (hr - i*hi) * (yr + i*yi)
    fr_ref[...] = (hr * yr + hi * yi) * inv
    fi_ref[...] = (hr * yi - hi * yr) * inv


# ----------------------------- tiling heuristics ---------------------------- #

def _spatial_tile(hw, c, target_bytes=1 << 20):
    """Largest lane-dense spatial tile (multiple of 128 dividing hw) whose
    (C, ts) f32 block stays under ~target_bytes; falls back to the full row."""
    cap = max(128, (target_bytes // 4) // max(c, 1))
    if hw <= cap:
        return hw                       # block dim == full array dim is always legal
    if hw % 128 != 0:
        return hw                       # cannot split lane-densely; take full row
    ts = (cap // 128) * 128
    while ts >= 128:
        if hw % ts == 0:
            return ts
        ts -= 128
    return hw


def _batch_tile(b, c, ts, target_bytes=1 << 20):
    """Fold batch elements into one block while the block stays small, to
    amortize per-grid-step overhead on tiny problems."""
    per_batch = c * ts * 4
    bt = int(max(1, min(b, target_bytes // max(per_batch, 1))))
    while b % bt != 0:
        bt -= 1
    return bt


# ------------------------------ module wrapper ------------------------------ #

def wiener_dec_forward(x, psf, weight_v, weight_g, alpha,
                       normalize_filters=True, clamp=True):
    """x: (B, C, H, W) f32, psf: (B, kh, kw) f32."""
    B, C, H, W = x.shape
    HW = H * W

    # nn.utils.weight_norm(dim=0): weight = g * v / ||v||_{filter}
    if normalize_filters:
        vnorm = jnp.sqrt(jnp.sum(weight_v ** 2, axis=(1, 2), keepdims=True))
        weight = weight_g * weight_v / vnorm
    else:
        weight = weight_v

    # TODO(synk): FFT/IFFT have no Pallas TPU equivalent; transforms stay in plain JAX.
    Y = jnp.fft.fft2(x)                               # (B, C, H, W) complex64
    Hotf = psf2otf(psf, (H, W))                       # (B, H, W)   complex64
    Gotf = psf2otf(weight, (H, W))                    # (nf, H, W)  complex64

    hr = jnp.real(Hotf).astype(jnp.float32)
    hi = jnp.imag(Hotf).astype(jnp.float32)

    # Grid-invariant regularizer map (tiny: H*W elements), hoisted out of the kernel.
    g2 = jnp.sum(jnp.real(Gotf) ** 2 + jnp.imag(Gotf) ** 2, axis=0)   # (H, W)
    reg = jnp.exp(alpha.reshape(())).astype(jnp.float32)
    reg_g2 = (reg * g2).astype(jnp.float32).reshape(1, 1, HW)         # (1, 1, HW)

    # Lane-dense layout: flatten spatial dims so the trailing axis is H*W.
    yr = jnp.real(Y).astype(jnp.float32).reshape(B, C, HW)
    yi = jnp.imag(Y).astype(jnp.float32).reshape(B, C, HW)
    hr2 = hr.reshape(B, 1, HW)
    hi2 = hi.reshape(B, 1, HW)

    ts = _spatial_tile(HW, C)
    bt = _batch_tile(B, C, ts)
    grid = (B // bt, HW // ts)

    y_spec = pl.BlockSpec((bt, C, ts), lambda b, t: (b, 0, t))
    h_spec = pl.BlockSpec((bt, 1, ts), lambda b, t: (b, 0, t))
    g_spec = pl.BlockSpec((1, 1, ts), lambda b, t: (0, 0, t))

    grid_spec = pltpu.PrefetchScalarGridSpec(
        num_scalar_prefetch=0,
        grid=grid,
        in_specs=[y_spec, y_spec, h_spec, h_spec, g_spec],
        out_specs=[y_spec, y_spec],
    )

    fr, fi = pl.pallas_call(
        wiener_freq_kernel,
        out_shape=(jax.ShapeDtypeStruct((B, C, HW), jnp.float32),
                   jax.ShapeDtypeStruct((B, C, HW), jnp.float32)),
        grid_spec=grid_spec,
        compiler_params=pltpu.CompilerParams(
            dimension_semantics=("parallel", "parallel")),
    )(yr, yi, hr2, hi2, reg_g2)

    Xf = jax.lax.complex(fr, fi).reshape(B, C, H, W)
    out = jnp.real(jnp.fft.ifft2(Xf)).astype(jnp.float32)

    if clamp:
        # Fused by XLA into the IFFT real-part extraction (no extra HBM pass).
        out = jnp.clip(out, -1.0, 1.0)
    return out


# -------------------------- pure-JAX reference ------------------------------ #

def wiener_dec_reference(x, psf, weight_v, weight_g, alpha,
                         normalize_filters=True, clamp=True):
    B, C, H, W = x.shape
    if normalize_filters:
        vnorm = jnp.sqrt(jnp.sum(weight_v ** 2, axis=(1, 2), keepdims=True))
        weight = weight_g * weight_v / vnorm
    else:
        weight = weight_v
    Y = jnp.fft.fft2(x)
    Hotf = psf2otf(psf, (H, W))
    Gotf = psf2otf(weight, (H, W))
    g2 = jnp.sum(jnp.abs(Gotf) ** 2, axis=0)
    den = jnp.abs(Hotf) ** 2 + jnp.exp(alpha.reshape(())) * g2[None]
    num = jnp.conj(Hotf)[:, None, :, :] * Y
    out = jnp.real(jnp.fft.ifft2(num / den[:, None, :, :])).astype(jnp.float32)
    if clamp:
        out = jnp.clip(out, -1.0, 1.0)
    return out


# ---------------------------------- main ------------------------------------ #

if __name__ == "__main__":
    key = jax.random.PRNGKey(0)
    k_w, k_x, k_psf = jax.random.split(key, 3)

    B, C, H, W = 2, 4, 16, 16
    kh, kw = FILTER_DIM

    # Deterministic parameter init (mirrors pure_wiener.__init__ + weight_norm).
    weight_v = manual_norm(
        jax.random.normal(k_w, (NUM_FILTERS, kh, kw), dtype=jnp.float32))
    weight_g = jnp.sqrt(jnp.sum(weight_v ** 2, axis=(1, 2), keepdims=True))  # g = ||v|| at init
    alpha = jnp.array([INIT_ALPHA], dtype=jnp.float32)

    # Example inputs.
    x = jax.random.normal(k_x, (B, C, H, W), dtype=jnp.float32)
    psf = jax.random.uniform(k_psf, (B, kh, kw), dtype=jnp.float32)
    psf = psf / jnp.sum(psf, axis=(-2, -1), keepdims=True)   # sum-to-one blur kernel

    out = wiener_dec_forward(x, psf, weight_v, weight_g, alpha,
                             normalize_filters=True, clamp=True)
    out = jax.block_until_ready(out)

    ref = jax.block_until_ready(
        wiener_dec_reference(x, psf, weight_v, weight_g, alpha,
                             normalize_filters=True, clamp=True))

    assert out.shape == (B, C, H, W)
    assert float(jnp.max(out)) <= 1.0 + 1e-6 and float(jnp.min(out)) >= -1.0 - 1e-6
    assert bool(jnp.allclose(out, ref, atol=1e-4, rtol=1e-4))
    print("KERNEL_OK")
</pallas_src>

<mosaic_0001>
module attributes {stable_mosaic.version = 11 : i64} {
  func.func @wiener_freq_kernel(%arg0: i32, %arg1: i32, %arg2: memref<2x4x256xf32, #tpu.memory_space<vmem>>, %arg3: memref<2x4x256xf32, #tpu.memory_space<vmem>>, %arg4: memref<2x1x256xf32, #tpu.memory_space<vmem>>, %arg5: memref<2x1x256xf32, #tpu.memory_space<vmem>>, %arg6: memref<1x1x256xf32, #tpu.memory_space<vmem>>, %arg7: memref<2x4x256xf32, #tpu.memory_space<vmem>>, %arg8: memref<2x4x256xf32, #tpu.memory_space<vmem>>) attributes {dimension_semantics = [#tpu.dimension_semantics<parallel>, #tpu.dimension_semantics<parallel>], iteration_bounds = array<i64: 1, 1>, scalar_prefetch = 0 : i64, scratch_operands = 0 : i64, tpu.core_type = #tpu.core_type<tc>, window_params = [{transform_indices = @transform_0, window_bounds = array<i64: 2, 4, 256>}, {transform_indices = @transform_1, window_bounds = array<i64: 2, 4, 256>}, {transform_indices = @transform_2, window_bounds = array<i64: 2, 1, 256>}, {transform_indices = @transform_3, window_bounds = array<i64: 2, 1, 256>}, {transform_indices = @transform_4, window_bounds = array<i64: 1, 1, 256>}, {transform_indices = @transform_5, window_bounds = array<i64: 2, 4, 256>}, {transform_indices = @transform_6, window_bounds = array<i64: 2, 4, 256>}]} {
    %c0 = arith.constant 0 : index
    %c0_0 = arith.constant 0 : index
    %c0_1 = arith.constant 0 : index
    %0 = vector.load %arg4[%c0, %c0_0, %c0_1] : memref<2x1x256xf32, #tpu.memory_space<vmem>>, vector<2x1x256xf32>
    %c0_2 = arith.constant 0 : index
    %c0_3 = arith.constant 0 : index
    %c0_4 = arith.constant 0 : index
    %1 = vector.load %arg5[%c0_2, %c0_3, %c0_4] : memref<2x1x256xf32, #tpu.memory_space<vmem>>, vector<2x1x256xf32>
    %c0_5 = arith.constant 0 : index
    %c0_6 = arith.constant 0 : index
    %c0_7 = arith.constant 0 : index
    %2 = vector.load %arg2[%c0_5, %c0_6, %c0_7] : memref<2x4x256xf32, #tpu.memory_space<vmem>>, vector<2x4x256xf32>
    %c0_8 = arith.constant 0 : index
    %c0_9 = arith.constant 0 : index
    %c0_10 = arith.constant 0 : index
    %3 = vector.load %arg3[%c0_8, %c0_9, %c0_10] : memref<2x4x256xf32, #tpu.memory_space<vmem>>, vector<2x4x256xf32>
    %4 = arith.mulf %0, %0 : vector<2x1x256xf32>
    %5 = arith.mulf %1, %1 : vector<2x1x256xf32>
    %6 = arith.addf %4, %5 : vector<2x1x256xf32>
    %c0_11 = arith.constant 0 : index
    %c0_12 = arith.constant 0 : index
    %c0_13 = arith.constant 0 : index
    %7 = vector.load %arg6[%c0_11, %c0_12, %c0_13] : memref<1x1x256xf32, #tpu.memory_space<vmem>>, vector<1x1x256xf32>
    %8 = vector.broadcast %7 : vector<1x1x256xf32> to vector<2x1x256xf32>
    %9 = arith.addf %6, %8 : vector<2x1x256xf32>
    %cst = arith.constant 1.000000e+00 : f32
    %10 = vector.broadcast %cst : f32 to vector<2x1x256xf32>
    %11 = arith.divf %10, %9 : vector<2x1x256xf32>
    %12 = vector.broadcast %0 : vector<2x1x256xf32> to vector<2x4x256xf32>
    %13 = arith.mulf %12, %2 : vector<2x4x256xf32>
    %14 = vector.broadcast %1 : vector<2x1x256xf32> to vector<2x4x256xf32>
    %15 = arith.mulf %14, %3 : vector<2x4x256xf32>
    %16 = arith.addf %13, %15 : vector<2x4x256xf32>
    %17 = vector.broadcast %11 : vector<2x1x256xf32> to vector<2x4x256xf32>
    %18 = arith.mulf %16, %17 : vector<2x4x256xf32>
    %c0_14 = arith.constant 0 : index
    %c0_15 = arith.constant 0 : index
    %c0_16 = arith.constant 0 : index
    %19 = vector.load %arg7[%c0_14, %c0_15, %c0_16] : memref<2x4x256xf32, #tpu.memory_space<vmem>>, vector<2x4x256xf32>
    tpu.vector_store %arg7[%c0_14, %c0_15, %c0_16], %18 {strides = array<i32>} : memref<2x4x256xf32, #tpu.memory_space<vmem>>, vector<2x4x256xf32>,
    %20 = vector.broadcast %0 : vector<2x1x256xf32> to vector<2x4x256xf32>
    %21 = arith.mulf %20, %3 : vector<2x4x256xf32>
    %22 = vector.broadcast %1 : vector<2x1x256xf32> to vector<2x4x256xf32>
    %23 = arith.mulf %22, %2 : vector<2x4x256xf32>
    %24 = arith.subf %21, %23 : vector<2x4x256xf32>
    %25 = vector.broadcast %11 : vector<2x1x256xf32> to vector<2x4x256xf32>
    %26 = arith.mulf %24, %25 : vector<2x4x256xf32>
    %c0_17 = arith.constant 0 : index
    %c0_18 = arith.constant 0 : index
    %c0_19 = arith.constant 0 : index
    %27 = vector.load %arg8[%c0_17, %c0_18, %c0_19] : memref<2x4x256xf32, #tpu.memory_space<vmem>>, vector<2x4x256xf32>
    tpu.vector_store %arg8[%c0_17, %c0_18, %c0_19], %26 {strides = array<i32>} : memref<2x4x256xf32, #tpu.memory_space<vmem>>, vector<2x4x256xf32>,
    return
  }
  func.func @transform_0(%arg0: i32, %arg1: i32) -> (i32, i32, i32) {
    %c0_i32 = arith.constant 0 : i32
    %c0_i32_0 = arith.constant 0 : i32
    return %arg0, %c0_i32, %arg1 : i32, i32, i32
  }
  func.func @transform_1(%arg0: i32, %arg1: i32) -> (i32, i32, i32) {
    %c0_i32 = arith.constant 0 : i32
    %c0_i32_0 = arith.constant 0 : i32
    return %arg0, %c0_i32, %arg1 : i32, i32, i32
  }
  func.func @transform_2(%arg0: i32, %arg1: i32) -> (i32, i32, i32) {
    %c0_i32 = arith.constant 0 : i32
    %c0_i32_0 = arith.constant 0 : i32
    return %arg0, %c0_i32, %arg1 : i32, i32, i32
  }
  func.func @transform_3(%arg0: i32, %arg1: i32) -> (i32, i32, i32) {
    %c0_i32 = arith.constant 0 : i32
    %c0_i32_0 = arith.constant 0 : i32
    return %arg0, %c0_i32, %arg1 : i32, i32, i32
  }
  func.func @transform_4(%arg0: i32, %arg1: i32) -> (i32, i32, i32) {
    %c0_i32 = arith.constant 0 : i32
    %c0_i32_0 = arith.constant 0 : i32
    %c0_i32_1 = arith.constant 0 : i32
    return %c0_i32, %c0_i32_0, %arg1 : i32, i32, i32
  }
  func.func @transform_5(%arg0: i32, %arg1: i32) -> (i32, i32, i32) {
    %c0_i32 = arith.constant 0 : i32
    %c0_i32_0 = arith.constant 0 : i32
    return %arg0, %c0_i32, %arg1 : i32, i32, i32
  }
  func.func @transform_6(%arg0: i32, %arg1: i32) -> (i32, i32, i32) {
    %c0_i32 = arith.constant 0 : i32
    %c0_i32_0 = arith.constant 0 : i32
    return %arg0, %c0_i32, %arg1 : i32, i32, i32
  }
}

</mosaic_0001>

<llo_original>
// kernel: tpu_custom_call.1
$region0: #{tpu_custom_call.1}
  #allocation0 [shape = 'u32[]', space=smem, size = 0x4, offset = 0x4, fixed_abs, tag = 'smem constant byte address 0x4 - core index']
  #allocation1 [shape = 'u32[72,128]{1,0:T(1,128)}', space=vmem, size = 0x9000, scoped, tag = 'internal scratch']
  %s0 = inlined_call_operand.hbm [shape: f32[2,4,256], index: 0, kind: input, shape index: {}]
  %s1 = inlined_call_operand.hbm [shape: f32[2,4,256], index: 1, kind: input, shape index: {}]
  %s2 = inlined_call_operand.hbm [shape: f32[2,1,256], index: 2, kind: input, shape index: {}]
  %s3 = inlined_call_operand.hbm [shape: f32[2,1,256], index: 3, kind: input, shape index: {}]
  %s4 = inlined_call_operand.vmem [shape: f32[1,1,256], index: 4, kind: input, shape index: {}]
  %s5 = inlined_call_operand.hbm [shape: f32[2,4,256], index: 5, kind: output, shape index: {0}]
  %s6 = inlined_call_operand.hbm [shape: f32[2,4,256], index: 6, kind: output, shape index: {1}]
  %7 = xla_tuple %s5, %s6
  %s8 = sld [smem:[#allocation0]]
  $region54: #{tpu_custom_call.1} parent=0
    _
  %s10 = ssub.s32 1, %s8
  %s11 = scalar_select 0, %s10, %s8
  $region1: #{tpu_custom_call.1} parent=0
    #allocation2 [shape = 'u8[8192]{0}', space=vmem, size = 0x2000, scoped, tag = 'input window, operand 0, single buffered']
    #allocation3 [shape = 's32[1]{0}', space=sflag, size = 0x4, scoped, tag = 'scoped memory for tpu_custom_call.1']
    #allocation4 [shape = 's32[1]{0}', space=sflag, size = 0x4, scoped, tag = 'scoped memory for tpu_custom_call.1']
    #allocation5 [shape = 'u8[8192]{0}', space=vmem, size = 0x2000, scoped, tag = 'input window, operand 1, single buffered']
    #allocation6 [shape = 's32[1]{0}', space=sflag, size = 0x4, scoped, tag = 'scoped memory for tpu_custom_call.1']
    #allocation7 [shape = 'u8[2048]{0}', space=vmem, size = 0x800, scoped, tag = 'input window, operand 2, single buffered']
    #allocation8 [shape = 'u8[2048]{0}', space=vmem, size = 0x800, scoped, tag = 'input window, operand 3, single buffered']
    #allocation9 [shape = 's32[1]{0}', space=sflag, size = 0x4, scoped, tag = 'scoped memory for tpu_custom_call.1']
    #allocation10 [shape = 'u8[8192]{0}', space=vmem, size = 0x2000, scoped, tag = 'output window, operand 0, single buffered']
    #allocation11 [shape = 'u8[8192]{0}', space=vmem, size = 0x2000, scoped, tag = 'output window, operand 1, single buffered']
    #allocation12 [shape = 's32[1]{0}', space=sflag, size = 0x4, scoped, tag = 'scoped memory for tpu_custom_call.1']
    %12 = vsyncpa [#allocation3], 0
    %13 = vsyncpa [#allocation6], 0
    %14 = vsyncpa [#allocation9], 0
    %15 = vsyncpa [#allocation4], 0
    %16 = vsyncpa [#allocation12], 0
    // Predicated region
    $region2: #{tpu_custom_call.1} parent=1 // pred_check
      _
    $region3: #{tpu_custom_call.1} parent=1 // pred_check_branch
      %18 = sbr.rel (0) target = $region5
    $region4: #{tpu_custom_call.1} parent=1 // pred_region
      %20 = vsyncadd [#allocation3], 0
      %s21 = sshll.u32 %s0, 4
      %s22 = int_to_ptr.hbm [resolvable:$true] %s21
      %s23 = sshll.u32 [#allocation2], 4
      %s24 = int_to_ptr.vmem [resolvable:$true] %s23
      %29 = dma.hbm_to_vmem [thread:$0]  %s22, 256, %s24, [#allocation3], 128, 128, 8
    $region5: #{tpu_custom_call.1} parent=1 // pred_fallthru
      _
    // Predicated region
    $region6: #{tpu_custom_call.1} parent=1 // pred_check
      _
    $region7: #{tpu_custom_call.1} parent=1 // pred_check_branch
      %31 = sbr.rel (0) target = $region9
    $region8: #{tpu_custom_call.1} parent=1 // pred_region
      %33 = vsyncadd [#allocation6], 0
      %s34 = sshll.u32 %s1, 4
      %s35 = int_to_ptr.hbm [resolvable:$true] %s34
      %s36 = sshll.u32 [#allocation5], 4
      %s37 = int_to_ptr.vmem [resolvable:$true] %s36
      %42 = dma.hbm_to_vmem [thread:$0]  %s35, 256, %s37, [#allocation6], 128, 128, 8
    $region9: #{tpu_custom_call.1} parent=1 // pred_fallthru
      _
    // Predicated region
    $region10: #{tpu_custom_call.1} parent=1 // pred_check
      _
    $region11: #{tpu_custom_call.1} parent=1 // pred_check_branch
      %44 = sbr.rel (0) target = $region13
    $region12: #{tpu_custom_call.1} parent=1 // pred_region
      %46 = vsyncadd [#allocation6], 0
      %s47 = sshll.u32 %s2, 4
      %s48 = int_to_ptr.hbm [resolvable:$true] %s47
      %s49 = sshll.u32 [#allocation7], 4
      %s50 = int_to_ptr.vmem [resolvable:$true] %s49
      %55 = dma.hbm_to_vmem [thread:$0]  %s48, 64, %s50, [#allocation6], 32, 32, 2
    $region13: #{tpu_custom_call.1} parent=1 // pred_fallthru
      _
    // Predicated region
    $region14: #{tpu_custom_call.1} parent=1 // pred_check
      _
    $region15: #{tpu_custom_call.1} parent=1 // pred_check_branch
      %57 = sbr.rel (0) target = $region17
    $region16: #{tpu_custom_call.1} parent=1 // pred_region
      %59 = vsyncadd [#allocation9], 0
      %s60 = sshll.u32 %s3, 4
      %s61 = int_to_ptr.hbm [resolvable:$true] %s60
      %s62 = sshll.u32 [#allocation8], 4
      %s63 = int_to_ptr.vmem [resolvable:$true] %s62
      %68 = dma.hbm_to_vmem [thread:$0]  %s61, 64, %s63, [#allocation9], 32, 32, 2
    $region17: #{tpu_custom_call.1} parent=1 // pred_fallthru
      _
    // Predicated region
    $region18: #{tpu_custom_call.1} parent=1 // pred_check
      _
    $region19: #{tpu_custom_call.1} parent=1 // pred_check_branch
      %70 = sbr.rel (0) target = $region21
    $region20: #{tpu_custom_call.1} parent=1 // pred_region
      _
    $region21: #{tpu_custom_call.1} parent=1 // pred_fallthru
      _
    // Predicated region
    $region22: #{tpu_custom_call.1} parent=1 // pred_check
      _
    $region23: #{tpu_custom_call.1} parent=1 // pred_check_branch
      %72 = sbr.rel (0) target = $region25
    $region24: #{tpu_custom_call.1} parent=1 // pred_region
      %74 = dma.done [#allocation3], 256
    $region25: #{tpu_custom_call.1} parent=1 // pred_fallthru
      _
    // Predicated region
    $region26: #{tpu_custom_call.1} parent=1 // pred_check
      _
    $region27: #{tpu_custom_call.1} parent=1 // pred_check_branch
      %76 = sbr.rel (0) target = $region29
    $region28: #{tpu_custom_call.1} parent=1 // pred_region
      %78 = dma.done [#allocation6], 256
    $region29: #{tpu_custom_call.1} parent=1 // pred_fallthru
      _
    // Predicated region
    $region30: #{tpu_custom_call.1} parent=1 // pred_check
      _
    $region31: #{tpu_custom_call.1} parent=1 // pred_check_branch
      %80 = sbr.rel (0) target = $region33
    $region32: #{tpu_custom_call.1} parent=1 // pred_region
      %82 = dma.done [#allocation6], 64
    $region33: #{tpu_custom_call.1} parent=1 // pred_fallthru
      _
    // Predicated region
    $region34: #{tpu_custom_call.1} parent=1 // pred_check
      _
    $region35: #{tpu_custom_call.1} parent=1 // pred_check_branch
      %84 = sbr.rel (0) target = $region37
    $region36: #{tpu_custom_call.1} parent=1 // pred_region
      %86 = dma.done [#allocation9], 64
    $region37: #{tpu_custom_call.1} parent=1 // pred_fallthru
      _
    %v87 = vld [vmem:[#allocation7] sm:$0x3]
    %v88 = vld [vmem:[#allocation7 + $0x2] sm:$0x3]
    %v89 = vld [vmem:[#allocation8] sm:$0x3]
    %v90 = vld [vmem:[#allocation8 + $0x2] sm:$0x3]
    %v91 = vld [vmem:[#allocation2] sm:$0xff]
    %v92 = vld [vmem:[#allocation2 + $0x8] sm:$0xff]
    %v93 = vld [vmem:[#allocation5] sm:$0xff]
    %v94 = vld [vmem:[#allocation5 + $0x8] sm:$0xff]
    %v95 = vmul.f32 %v87, %v87
    %v96 = vmul.f32 %v88, %v88
    %v97 = vmul.f32 %v89, %v89
    %v98 = vmul.f32 %v90, %v90
    %v99 = vadd.f32 %v95, %v97
    %v100 = vadd.f32 %v96, %v98
    %v101 = vld [vmem:[%s4] sm:$0x3]
    %v102 = vadd.f32 %v99, %v101
    %v103 = vadd.f32 %v100, %v101
    %v104 = vrcp.pop %v102
    %v105 = vmul.f32 %v102, %v104
    %v106 = vsub.f32 1.0, %v105
    %v107 = vmul.f32 %v104, %v106
    %v108 = vadd.f32 %v104, %v107
    %vm109 = vweird.f32 %v102
    %vm110 = vweird.f32 %v104
    %vm111 = vmor %vm109, %vm110
    %v112 = vsel %vm111, %v104, %v108
    %v113 = vand.u32 2147483647, %v102
    %vm114 = vcmp.eq.f32.partialorder %v113, 8.507059e+37
    %v115 = vand.u32 %v102, 2147483648
    %v116 = vor.u32 1.1754944e-38, %v115
    %v117 = vsel %vm114, %v116, %v112
    %v118 = vmul.f32 1.0, %v117
    %v119 = vrcp.pop %v103
    %v120 = vmul.f32 %v103, %v119
    %v121 = vsub.f32 1.0, %v120
    %v122 = vmul.f32 %v119, %v121
    %v123 = vadd.f32 %v119, %v122
    %vm124 = vweird.f32 %v103
    %vm125 = vweird.f32 %v119
    %vm126 = vmor %vm124, %vm125
    %v127 = vsel %vm126, %v119, %v123
    %v128 = vand.u32 2147483647, %v103
    %vm129 = vcmp.eq.f32.partialorder %v128, 8.507059e+37
    %v130 = vand.u32 %v103, 2147483648
    %v131 = vor.u32 1.1754944e-38, %v130
    %v132 = vsel %vm129, %v131, %v127
    %v133 = vmul.f32 1.0, %v132
    %v136 = vperm.slane %v87, 0
    %v137 = vperm.slane %v87, 1
    %v138 = vperm.slane %v88, 0
    %v139 = vperm.slane %v88, 1
    %146 = vst [vmem:[#allocation1] ss:$2 sm:$0xff] %v91
    %v147 = vld.sshfl [vmem:[#allocation1] sm:$0xff pattern:$0x75316420]
    %v148 = vld.sshfl [vmem:[#allocation1 + $0x8] sm:$0xff pattern:$0x75316420]
    %s149 = scalar_lea.vmem [#allocation1], 16
    %150 = vst [vmem:[%s149] ss:$2 sm:$0xff] %v92
    %v151 = vld.sshfl [vmem:[#allocation1 + $0x10] sm:$0xff pattern:$0x75316420]
    %v152 = vld.sshfl [vmem:[#allocation1 + $0x18] sm:$0xff pattern:$0x75316420]
    %v157 = vmul.f32 %v136, %v147
    %v158 = vmul.f32 %v137, %v148
    %v159 = vmul.f32 %v138, %v151
    %v160 = vmul.f32 %v139, %v152
    %v163 = vperm.slane %v89, 0
    %v164 = vperm.slane %v89, 1
    %v165 = vperm.slane %v90, 0
    %v166 = vperm.slane %v90, 1
    %173 = vst [vmem:[#allocation1] ss:$2 sm:$0xff] %v93
    %v174 = vld.sshfl [vmem:[#allocation1] sm:$0xff pattern:$0x75316420]
    %v175 = vld.sshfl [vmem:[#allocation1 + $0x8] sm:$0xff pattern:$0x75316420]
    %s176 = scalar_lea.vmem [#allocation1], 16
    %177 = vst [vmem:[%s176] ss:$2 sm:$0xff] %v94
    %v178 = vld.sshfl [vmem:[#allocation1 + $0x10] sm:$0xff pattern:$0x75316420]
    %v179 = vld.sshfl [vmem:[#allocation1 + $0x18] sm:$0xff pattern:$0x75316420]
    %v184 = vmul.f32 %v163, %v174
    %v185 = vmul.f32 %v164, %v175
    %v186 = vmul.f32 %v165, %v178
    %v187 = vmul.f32 %v166, %v179
    %v188 = vadd.f32 %v157, %v184
    %v189 = vadd.f32 %v158, %v185
    %v190 = vadd.f32 %v159, %v186
    %v191 = vadd.f32 %v160, %v187
    %v194 = vperm.slane %v118, 0
    %v195 = vperm.slane %v118, 1
    %v196 = vperm.slane %v133, 0
    %v197 = vperm.slane %v133, 1
    %v202 = vmul.f32 %v188, %v194
    %v203 = vmul.f32 %v189, %v195
    %v204 = vmul.f32 %v190, %v196
    %v205 = vmul.f32 %v191, %v197
    %v210 = vrot.slane %v203, 4
    %v211 = vrot.slane %v205, 4
    %vm212 = vcmask 1043456
    %v213 = vsel %vm212, %v202, %v210
    %v214 = vsel %vm212, %v204, %v211
    %217 = vst [vmem:[#allocation10] sm:$0xff] %v213
    %218 = vst [vmem:[#allocation10 + $0x8] sm:$0xff] %v214
    %219 = vst [vmem:[#allocation1] ss:$2 sm:$0xff] %v93
    %v220 = vld.sshfl [vmem:[#allocation1] sm:$0xff pattern:$0x75316420]
    %v221 = vld.sshfl [vmem:[#allocation1 + $0x8] sm:$0xff pattern:$0x75316420]
    %s222 = scalar_lea.vmem [#allocation1], 16
    %223 = vst [vmem:[%s222] ss:$2 sm:$0xff] %v94
    %v224 = vld.sshfl [vmem:[#allocation1 + $0x10] sm:$0xff pattern:$0x75316420]
    %v225 = vld.sshfl [vmem:[#allocation1 + $0x18] sm:$0xff pattern:$0x75316420]
    %v230 = vmul.f32 %v136, %v220
    %v231 = vmul.f32 %v137, %v221
    %v232 = vmul.f32 %v138, %v224
    %v233 = vmul.f32 %v139, %v225
    %234 = vst [vmem:[#allocation1] ss:$2 sm:$0xff] %v91
    %v235 = vld.sshfl [vmem:[#allocation1] sm:$0xff pattern:$0x75316420]
    %v236 = vld.sshfl [vmem:[#allocation1 + $0x8] sm:$0xff pattern:$0x75316420]
    %s237 = scalar_lea.vmem [#allocation1], 16
    %238 = vst [vmem:[%s237] ss:$2 sm:$0xff] %v92
    %v239 = vld.sshfl [vmem:[#allocation1 + $0x10] sm:$0xff pattern:$0x75316420]
    %v240 = vld.sshfl [vmem:[#allocation1 + $0x18] sm:$0xff pattern:$0x75316420]
    %v245 = vmul.f32 %v163, %v235
    %v246 = vmul.f32 %v164, %v236
    %v247 = vmul.f32 %v165, %v239
    %v248 = vmul.f32 %v166, %v240
    %v249 = vsub.f32 %v230, %v245
    %v250 = vsub.f32 %v231, %v246
    %v251 = vsub.f32 %v232, %v247
    %v252 = vsub.f32 %v233, %v248
    %v253 = vmul.f32 %v249, %v194
    %v254 = vmul.f32 %v250, %v195
    %v255 = vmul.f32 %v251, %v196
    %v256 = vmul.f32 %v252, %v197
    %v261 = vrot.slane %v254, 4
    %v262 = vrot.slane %v256, 4
    %v263 = vsel %vm212, %v253, %v261
    %v264 = vsel %vm212, %v255, %v262
    %267 = vst [vmem:[#allocation11] sm:$0xff] %v263
    %268 = vst [vmem:[#allocation11 + $0x8] sm:$0xff] %v264
    // Predicated region
    $region38: #{tpu_custom_call.1} parent=1 // pred_check
      _
    $region39: #{tpu_custom_call.1} parent=1 // pred_check_branch
      %270 = sbr.rel (0) target = $region41
    $region40: #{tpu_custom_call.1} parent=1 // pred_region
      %272 = vsyncadd [#allocation4], 0
      %s273 = sshll.u32 [#allocation10], 4
      %s274 = int_to_ptr.vmem [resolvable:$true] %s273
      %s275 = sshll.u32 %s5, 4
      %s276 = int_to_ptr.hbm [resolvable:$true] %s275
      %281 = dma.vmem_to_hbm [thread:$0]  %s274, 256, %s276, [#allocation4], 128, 128, 8
    $region41: #{tpu_custom_call.1} parent=1 // pred_fallthru
      _
    // Predicated region
    $region42: #{tpu_custom_call.1} parent=1 // pred_check
      _
    $region43: #{tpu_custom_call.1} parent=1 // pred_check_branch
      %283 = sbr.rel (0) target = $region45
    $region44: #{tpu_custom_call.1} parent=1 // pred_region
      %285 = vsyncadd [#allocation12], 0
      %s286 = sshll.u32 [#allocation11], 4
      %s287 = int_to_ptr.vmem [resolvable:$true] %s286
      %s288 = sshll.u32 %s6, 4
      %s289 = int_to_ptr.hbm [resolvable:$true] %s288
      %294 = dma.vmem_to_hbm [thread:$0]  %s287, 256, %s289, [#allocation12], 128, 128, 8
    $region45: #{tpu_custom_call.1} parent=1 // pred_fallthru
      _
    // Predicated region
    $region46: #{tpu_custom_call.1} parent=1 // pred_check
      _
    $region47: #{tpu_custom_call.1} parent=1 // pred_check_branch
      %296 = sbr.rel (0) target = $region49
    $region48: #{tpu_custom_call.1} parent=1 // pred_region
      %298 = dma.done [#allocation4], 256
    $region49: #{tpu_custom_call.1} parent=1 // pred_fallthru
      _
    // Predicated region
    $region50: #{tpu_custom_call.1} parent=1 // pred_check
      _
    $region51: #{tpu_custom_call.1} parent=1 // pred_check_branch
      %300 = sbr.rel (0) target = $region53
    $region52: #{tpu_custom_call.1} parent=1 // pred_region
      %302 = dma.done [#allocation12], 256
    $region53: #{tpu_custom_call.1} parent=1 // pred_fallthru
      _
    %303 = vsyncpa [#allocation3], 1
    %304 = vsyncpa [#allocation6], 1
    %305 = vsyncpa [#allocation9], 1
    %306 = vsyncpa [#allocation4], 1
    %307 = vsyncpa [#allocation12], 1

</llo_original>
